<compile_context>
chip_gen: v5e
topology: v5e:2x2
jax: 0.10.0
libtpu: 0.0.40
codegen_flags: <defaults>
</compile_context>

<pallas_src>
import jax
import jax.numpy as jnp
from jax.experimental import pallas as pl
from jax.experimental.pallas import tpu as pltpu

_TM = 128        # destination-node (output row) tile
_TK = 128        # source-node (reduction) tile; production: sweep 256-1024
_LANE = 128      # feature pad multiple (lane width)
_NODE_PAD = 128  # node counts padded to this (multiple of _TM and _TK)


def _ru(x, m):
    return (x + m - 1) // m * m


def _pad2d(x, rows, cols, dtype):
    return jnp.pad(x, ((0, rows - x.shape[0]), (0, cols - x.shape[1]))).astype(dtype)


# ---------------------------------------------------------------------------
# Kernels
# ---------------------------------------------------------------------------
def _matmul_kernel(x_ref, w_ref, o_ref, acc_ref):
    """o = x @ w, tiled over (rows, reduction); bf16 inputs, f32 accumulate."""
    k = pl.program_id(1)

    @pl.when(k == 0)
    def _():
        acc_ref[...] = jnp.zeros_like(acc_ref)

    acc_ref[...] += jnp.dot(x_ref[...], w_ref[...],
                            preferred_element_type=jnp.float32)

    @pl.when(k == pl.num_programs(1) - 1)
    def _():
        o_ref[...] = acc_ref[...].astype(o_ref.dtype)


def _gcn_mid_kernel(a_ref, hw_ref, norm_ref, b_ref, wnext_ref, o_ref, acc_ref):
    """Intermediate GCN layer fused with the next layer's weight transform:
       o = relu(norm * (A @ HW) + b) @ W_next    (f32 accumulate throughout)."""
    k = pl.program_id(1)

    @pl.when(k == 0)
    def _():
        acc_ref[...] = jnp.zeros_like(acc_ref)

    acc_ref[...] += jnp.dot(a_ref[...], hw_ref[...],
                            preferred_element_type=jnp.float32)

    @pl.when(k == pl.num_programs(1) - 1)
    def _():
        lin = acc_ref[...] * norm_ref[...] + b_ref[...]
        h = jnp.maximum(lin, 0.0).astype(wnext_ref.dtype)
        o_ref[...] = jnp.dot(h, wnext_ref[...],
                             preferred_element_type=jnp.float32).astype(o_ref.dtype)


def _gcn_last_kernel(a_ref, hw_ref, norm_ref, b_ref,
                     wlin_ref, wrelu_ref, bfc_ref, o_ref, acc_ref):
    """Last GCN layer (skip_start concat) fused with the final fc:
       lin    = norm * (A @ HW) + b
       logits = lin @ Wfc_top + relu(lin) @ Wfc_bot + bfc
       (== concat(lin, relu(lin), dim=1) @ Wfc + bfc, concat never built)."""
    k = pl.program_id(1)

    @pl.when(k == 0)
    def _():
        acc_ref[...] = jnp.zeros_like(acc_ref)

    acc_ref[...] += jnp.dot(a_ref[...], hw_ref[...],
                            preferred_element_type=jnp.float32)

    @pl.when(k == pl.num_programs(1) - 1)
    def _():
        lin = acc_ref[...] * norm_ref[...] + b_ref[...]
        lin16 = lin.astype(wlin_ref.dtype)
        relu16 = jnp.maximum(lin, 0.0).astype(wrelu_ref.dtype)
        o_ref[...] = (
            jnp.dot(lin16, wlin_ref[...], preferred_element_type=jnp.float32)
            + jnp.dot(relu16, wrelu_ref[...], preferred_element_type=jnp.float32)
            + bfc_ref[...])


# ---------------------------------------------------------------------------
# pallas_call wrappers
# ---------------------------------------------------------------------------
_DIMSEM = pltpu.CompilerParams(dimension_semantics=("parallel", "arbitrary"))


def _matmul(x, w):
    m, kdim = x.shape
    n = w.shape[1]
    return pl.pallas_call(
        _matmul_kernel,
        out_shape=jax.ShapeDtypeStruct((m, n), jnp.bfloat16),
        grid_spec=pltpu.PrefetchScalarGridSpec(
            num_scalar_prefetch=0,
            grid=(m // _TM, kdim // _TK),
            in_specs=[pl.BlockSpec((_TM, _TK), lambda i, k: (i, k)),
                      pl.BlockSpec((_TK, n), lambda i, k: (k, 0))],
            out_specs=pl.BlockSpec((_TM, n), lambda i, k: (i, 0)),
            scratch_shapes=[pltpu.VMEM((_TM, n), jnp.float32)]),
        compiler_params=_DIMSEM,
    )(x, w)


def _gcn_mid(a, hw, norm, b, w_next):
    n_out, n_in = a.shape
    f = hw.shape[1]
    f_next = w_next.shape[1]
    return pl.pallas_call(
        _gcn_mid_kernel,
        out_shape=jax.ShapeDtypeStruct((n_out, f_next), jnp.bfloat16),
        grid_spec=pltpu.PrefetchScalarGridSpec(
            num_scalar_prefetch=0,
            grid=(n_out // _TM, n_in // _TK),
            in_specs=[pl.BlockSpec((_TM, _TK), lambda i, k: (i, k)),    # A block
                      pl.BlockSpec((_TK, f), lambda i, k: (k, 0)),      # H @ W
                      pl.BlockSpec((_TM, 1), lambda i, k: (i, 0)),      # norm
                      pl.BlockSpec((1, f), lambda i, k: (0, 0)),        # bias
                      pl.BlockSpec((f, f_next), lambda i, k: (0, 0))],  # next W
            out_specs=pl.BlockSpec((_TM, f_next), lambda i, k: (i, 0)),
            scratch_shapes=[pltpu.VMEM((_TM, f), jnp.float32)]),
        compiler_params=_DIMSEM,
    )(a, hw, norm, b, w_next)


def _gcn_last(a, hw, norm, b, w_lin, w_relu, b_fc):
    n_out, n_in = a.shape
    f = hw.shape[1]
    c = w_lin.shape[1]
    return pl.pallas_call(
        _gcn_last_kernel,
        out_shape=jax.ShapeDtypeStruct((n_out, c), jnp.float32),
        grid_spec=pltpu.PrefetchScalarGridSpec(
            num_scalar_prefetch=0,
            grid=(n_out // _TM, n_in // _TK),
            in_specs=[pl.BlockSpec((_TM, _TK), lambda i, k: (i, k)),    # A block
                      pl.BlockSpec((_TK, f), lambda i, k: (k, 0)),      # H @ W
                      pl.BlockSpec((_TM, 1), lambda i, k: (i, 0)),      # norm
                      pl.BlockSpec((1, f), lambda i, k: (0, 0)),        # bias
                      pl.BlockSpec((f, c), lambda i, k: (0, 0)),        # Wfc top
                      pl.BlockSpec((f, c), lambda i, k: (0, 0)),        # Wfc bottom
                      pl.BlockSpec((1, c), lambda i, k: (0, 0))],       # fc bias
            out_specs=pl.BlockSpec((_TM, c), lambda i, k: (i, 0)),
            scratch_shapes=[pltpu.VMEM((_TM, f), jnp.float32)]),
        compiler_params=_DIMSEM,
    )(a, hw, norm, b, w_lin, w_relu, b_fc)


# ---------------------------------------------------------------------------
# MiniBatchGCNInfer forward
# ---------------------------------------------------------------------------
def minibatch_gcn_infer(node_features, blocks, norms, layer_params, fc_params):
    """node_features: [N0, in_feats]; blocks[i]: [N_{i+1}, N_i] 0/1 adjacency;
    norms[i]: [N_{i+1}, 1]; layer_params: list of (W [F_in,F_out], b [1,F_out]);
    fc_params: (Wfc [2*n_hidden, n_classes], bfc [1, n_classes])."""
    n_layers = len(layer_params)
    counts = [node_features.shape[0]] + [a.shape[0] for a in blocks]
    npad = [_ru(c, _NODE_PAD) for c in counts]

    in_feats = node_features.shape[1]
    n_hidden = layer_params[0][0].shape[1]
    w_fc, b_fc = fc_params
    n_classes = w_fc.shape[1]
    f_in = _ru(in_feats, _LANE)
    f_h = _ru(n_hidden, _LANE)
    f_c = _ru(n_classes, _LANE)

    # Zero-pad + cast once in the wrapper (exact: padded A columns / W rows and
    # columns are zero, so padding never leaks into real outputs).
    x = _pad2d(node_features, npad[0], f_in, jnp.bfloat16)
    a_p = [_pad2d(blocks[i], npad[i + 1], npad[i], jnp.bfloat16) for i in range(n_layers)]
    nm_p = [_pad2d(norms[i], npad[i + 1], 1, jnp.float32) for i in range(n_layers)]
    w_p, b_p = [], []
    for i, (w, b) in enumerate(layer_params):
        fi = f_in if i == 0 else f_h
        w_p.append(_pad2d(w, fi, f_h, jnp.bfloat16))
        b_p.append(_pad2d(b, 1, f_h, jnp.float32))
    w_lin = _pad2d(w_fc[:n_hidden], f_h, f_c, jnp.bfloat16)   # multiplies lin
    w_relu = _pad2d(w_fc[n_hidden:], f_h, f_c, jnp.bfloat16)  # multiplies relu(lin)
    bfc = _pad2d(b_fc, 1, f_c, jnp.float32)

    # Reassociated layer-0 weight transform: A@(H@W) == (A@H)@W (norm row-wise).
    hw = _matmul(x, w_p[0])
    out = None
    for i in range(n_layers):
        if i < n_layers - 1:
            hw = _gcn_mid(a_p[i], hw, nm_p[i], b_p[i], w_p[i + 1])
        else:
            out = _gcn_last(a_p[i], hw, nm_p[i], b_p[i], w_lin, w_relu, bfc)
    # TODO(synk): for very small NodeFlows, a single fused pallas_call holding
    # all layers' weights in VMEM would also remove inter-layer HBM round trips.
    return out[:counts[-1], :n_classes]


# ---------------------------------------------------------------------------
# References for correctness checking
# ---------------------------------------------------------------------------
def reference_f32(node_features, blocks, norms, layer_params, fc_params):
    """Faithful f32 transcription of the PyTorch module."""
    n_layers = len(layer_params)
    h = node_features
    for i, (w, b) in enumerate(layer_params):
        agg = (blocks[i] @ h) * norms[i]
        lin = agg @ w + b
        if i == n_layers - 1:
            h = jnp.concatenate([lin, jnp.maximum(lin, 0.0)], axis=1)
        else:
            h = jnp.maximum(lin, 0.0)
    w_fc, b_fc = fc_params
    return h @ w_fc + b_fc


def reference_mixed(node_features, blocks, norms, layer_params, fc_params):
    """Mirrors the kernel's bf16/f32 mixed-precision schedule exactly."""
    n_layers = len(layer_params)
    bf, f32 = jnp.bfloat16, jnp.float32
    hw = jnp.dot(node_features.astype(bf), layer_params[0][0].astype(bf),
                 preferred_element_type=f32).astype(bf)
    for i, (w, b) in enumerate(layer_params):
        agg = jnp.dot(blocks[i].astype(bf), hw, preferred_element_type=f32)
        lin = agg * norms[i] + b
        if i < n_layers - 1:
            w_next = layer_params[i + 1][0].astype(bf)
            hw = jnp.dot(jnp.maximum(lin, 0.0).astype(bf), w_next,
                         preferred_element_type=f32).astype(bf)
        else:
            w_fc, b_fc = fc_params
            nh = w.shape[1]
            return (jnp.dot(lin.astype(bf), w_fc[:nh].astype(bf),
                            preferred_element_type=f32)
                    + jnp.dot(jnp.maximum(lin, 0.0).astype(bf),
                              w_fc[nh:].astype(bf), preferred_element_type=f32)
                    + b_fc)


if __name__ == "__main__":
    # small synthetic NodeFlow: 2 GCN layers -> 3 node layers
    # (node counts are deliberately NOT multiples of 128 to exercise padding,
    #  and large enough to exercise multi-tile row + reduction grids)
    in_feats, n_hidden, n_classes, n_layers = 16, 32, 8, 2
    n0, n1, n2 = 300, 150, 40

    key = jax.random.PRNGKey(0)
    ks = jax.random.split(key, 10)

    node_features = jax.random.normal(ks[0], (n0, in_feats), jnp.float32)
    a1 = (jax.random.uniform(ks[1], (n1, n0)) < 0.25).astype(jnp.float32)
    a2 = (jax.random.uniform(ks[2], (n2, n1)) < 0.25).astype(jnp.float32)
    norm1 = 1.0 / jnp.maximum(a1.sum(axis=1, keepdims=True), 1.0)
    norm2 = 1.0 / jnp.maximum(a2.sum(axis=1, keepdims=True), 1.0)

    w0 = jax.random.normal(ks[3], (in_feats, n_hidden), jnp.float32) * 0.1
    b0 = jax.random.normal(ks[4], (1, n_hidden), jnp.float32) * 0.1
    w1 = jax.random.normal(ks[5], (n_hidden, n_hidden), jnp.float32) * 0.1
    b1 = jax.random.normal(ks[6], (1, n_hidden), jnp.float32) * 0.1
    w_fc = jax.random.normal(ks[7], (2 * n_hidden, n_classes), jnp.float32) * 0.1
    b_fc = jax.random.normal(ks[8], (1, n_classes), jnp.float32) * 0.1

    blocks = [a1, a2]
    norms = [norm1, norm2]
    layer_params = [(w0, b0), (w1, b1)]
    fc_params = (w_fc, b_fc)

    out = minibatch_gcn_infer(node_features, blocks, norms, layer_params, fc_params)
    out = jax.block_until_ready(out)
    assert out.shape == (n2, n_classes), out.shape

    ref_mixed = reference_mixed(node_features, blocks, norms, layer_params, fc_params)
    ref_full = reference_f32(node_features, blocks, norms, layer_params, fc_params)
    # exact schedule match (bf16 inputs, f32 accumulate)
    assert jnp.allclose(out, ref_mixed, atol=2e-3, rtol=2e-3), "mismatch vs mixed-precision reference"
    # bounded precision loss vs the full-f32 module semantics
    assert jnp.allclose(out, ref_full, atol=3e-2, rtol=3e-2), "mismatch vs f32 reference"

    print("KERNEL_OK")
</pallas_src>

<mosaic_0001>
module attributes {stable_mosaic.version = 11 : i64} {
  func.func @_matmul_kernel(%arg0: i32, %arg1: i32, %arg2: memref<128x128xbf16, #tpu.memory_space<vmem>>, %arg3: memref<128x128xbf16, #tpu.memory_space<vmem>>, %arg4: memref<128x128xbf16, #tpu.memory_space<vmem>>, %arg5: memref<128x128xf32, #tpu.memory_space<vmem>>) attributes {dimension_semantics = [#tpu.dimension_semantics<parallel>, #tpu.dimension_semantics<arbitrary>], iteration_bounds = array<i64: 3, 1>, scalar_prefetch = 0 : i64, scratch_operands = 1 : i64, tpu.core_type = #tpu.core_type<tc>, window_params = [{transform_indices = @transform_0, window_bounds = array<i64: 128, 128>}, {transform_indices = @transform_1, window_bounds = array<i64: 128, 128>}, {transform_indices = @transform_2, window_bounds = array<i64: 128, 128>}]} {
    %c0_i32 = arith.constant 0 : i32
    %0 = arith.cmpi eq, %arg1, %c0_i32 : i32
    %1 = arith.extui %0 : i1 to i32
    %c0_i32_0 = arith.constant 0 : i32
    %2 = arith.cmpi ne, %1, %c0_i32_0 : i32
    scf.if %2 {
      %cst_10 = arith.constant 0.000000e+00 : f32
      %12 = vector.broadcast %cst_10 : f32 to vector<128x128xf32>
      %c0_11 = arith.constant 0 : index
      %c0_12 = arith.constant 0 : index
      %13 = vector.load %arg5[%c0_11, %c0_12] : memref<128x128xf32, #tpu.memory_space<vmem>>, vector<128x128xf32>
      tpu.vector_store %arg5[%c0_11, %c0_12], %12 {strides = array<i32>} : memref<128x128xf32, #tpu.memory_space<vmem>>, vector<128x128xf32>,
    } else {
    }
    %c0 = arith.constant 0 : index
    %c0_1 = arith.constant 0 : index
    %3 = vector.load %arg5[%c0, %c0_1] : memref<128x128xf32, #tpu.memory_space<vmem>>, vector<128x128xf32>
    %c0_2 = arith.constant 0 : index
    %c0_3 = arith.constant 0 : index
    %4 = vector.load %arg2[%c0_2, %c0_3] : memref<128x128xbf16, #tpu.memory_space<vmem>>, vector<128x128xbf16>
    %c0_4 = arith.constant 0 : index
    %c0_5 = arith.constant 0 : index
    %5 = vector.load %arg3[%c0_4, %c0_5] : memref<128x128xbf16, #tpu.memory_space<vmem>>, vector<128x128xbf16>
    %cst = arith.constant dense<0.000000e+00> : vector<128x128xf32>
    %6 = tpu.matmul %4, %5, %cst {dimension_numbers = #tpu.dot_dimension_numbers<[1], [0], [0], [1], [0, 0, 1, 1], [], []>} : vector<128x128xbf16>, vector<128x128xbf16>, vector<128x128xf32> -> vector<128x128xf32>
    %7 = arith.addf %3, %6 : vector<128x128xf32>
    %c0_6 = arith.constant 0 : index
    %c0_7 = arith.constant 0 : index
    %8 = vector.load %arg5[%c0_6, %c0_7] : memref<128x128xf32, #tpu.memory_space<vmem>>, vector<128x128xf32>
    tpu.vector_store %arg5[%c0_6, %c0_7], %7 {strides = array<i32>} : memref<128x128xf32, #tpu.memory_space<vmem>>, vector<128x128xf32>,
    %c0_i32_8 = arith.constant 0 : i32
    %9 = arith.cmpi eq, %arg1, %c0_i32_8 : i32
    %10 = arith.extui %9 : i1 to i32
    %c0_i32_9 = arith.constant 0 : i32
    %11 = arith.cmpi ne, %10, %c0_i32_9 : i32
    scf.if %11 {
      %c0_10 = arith.constant 0 : index
      %c0_11 = arith.constant 0 : index
      %12 = vector.load %arg5[%c0_10, %c0_11] : memref<128x128xf32, #tpu.memory_space<vmem>>, vector<128x128xf32>
      %13 = arith.truncf %12 : vector<128x128xf32> to vector<128x128xbf16>
      %c0_12 = arith.constant 0 : index
      %c0_13 = arith.constant 0 : index
      %14 = vector.load %arg4[%c0_12, %c0_13] : memref<128x128xbf16, #tpu.memory_space<vmem>>, vector<128x128xbf16>
      tpu.vector_store %arg4[%c0_12, %c0_13], %13 {strides = array<i32>} : memref<128x128xbf16, #tpu.memory_space<vmem>>, vector<128x128xbf16>,
    } else {
    }
    return
  }
  func.func @transform_0(%arg0: i32, %arg1: i32) -> (i32, i32) {
    %c0_i32 = arith.constant 0 : i32
    return %arg0, %arg1 : i32, i32
  }
  func.func @transform_1(%arg0: i32, %arg1: i32) -> (i32, i32) {
    %c0_i32 = arith.constant 0 : i32
    %c0_i32_0 = arith.constant 0 : i32
    return %arg1, %c0_i32 : i32, i32
  }
  func.func @transform_2(%arg0: i32, %arg1: i32) -> (i32, i32) {
    %c0_i32 = arith.constant 0 : i32
    %c0_i32_0 = arith.constant 0 : i32
    return %arg0, %c0_i32 : i32, i32
  }
}

</mosaic_0001>

<llo_original>
// kernel: tpu_custom_call.1
$region0: #{tpu_custom_call.1}
  #allocation0 [shape = 'u32[]', space=smem, size = 0x4, offset = 0x4, fixed_abs, tag = 'smem constant byte address 0x4 - core index']
  #allocation1 [shape = 'u32[72,128]{1,0:T(1,128)}', space=vmem, size = 0x9000, scoped, tag = 'internal scratch']
  #allocation2 [shape = 'f32[128,128]{1,0:T(8,128)}', space=vmem, size = 0x10000, scoped, tag = 'scratch operand']
  %s0 = inlined_call_operand.hbm [shape: bf16[384,128], index: 0, kind: input, shape index: {}]
  %s1 = inlined_call_operand.hbm [shape: bf16[128,128], index: 1, kind: input, shape index: {}]
  %s2 = inlined_call_operand.hbm [shape: bf16[384,128], index: 2, kind: output, shape index: {}]
  %s3 = sld [smem:[#allocation0]]
  $region57: #{tpu_custom_call.1} parent=0
    _
  %s5 = ssub.s32 1, %s3
  %s6 = scalar_select 0, %s5, %s3
  $region1: #{tpu_custom_call.1} parent=0
    #allocation3 [shape = 'u8[65536]{0}', space=vmem, size = 0x10000, scoped, tag = 'input window, operand 0']
    #allocation4 [shape = 's32[2]{0}', space=sflag, size = 0x8, scoped, tag = 'scoped memory for tpu_custom_call.1']
    #allocation5 [shape = 's32[2]{0}', space=sflag, size = 0x8, scoped, tag = 'scoped memory for tpu_custom_call.1']
    #allocation6 [shape = 'u8[32768]{0}', space=vmem, size = 0x8000, scoped, tag = 'input window, operand 1, single buffered']
    #allocation7 [shape = 's32[1]{0}', space=sflag, size = 0x4, scoped, tag = 'scoped memory for tpu_custom_call.1']
    #allocation8 [shape = 'u8[65536]{0}', space=vmem, size = 0x10000, scoped, tag = 'output window, operand 0']
    %7 = vsyncpa [#allocation4], 0
    %s8 = scalar_lea.sflag [#allocation4], 1
    %9 = vsyncpa %s8, 0
    %10 = vsyncpa [#allocation7], 0
    %11 = vsyncpa [#allocation5], 0
    %s12 = scalar_lea.sflag [#allocation5], 1
    %13 = vsyncpa %s12, 0
    loop: start=0, step=1, limit=5
    $region2: #{tpu_custom_call.1} parent=1 // loop_pre_header
      _
    $region3: #{tpu_custom_call.1} parent=1 // loop_header
      %s15 = sphi 0, %s19
      %p16 = scmp.ge.s32.totalorder %s15, 5
      %s22 = sphi 0, %s34
      %s23 = sphi 0, %s30
      %s24 = sphi 0, %s22
      %s25 = sphi 0, %s23
      %s26 = sphi 0, %s24
      %s27 = sphi 0, %s25
      %s39 = sphi 0, %s41
      %s42 = sphi 0, %s39
      %s43 = sphi 0, %s42
      %s59 = sphi 0, %s43
      %s65 = sphi 0, %s67
      %s68 = sphi 0, %s65
      %s69 = sphi 0, %s68
      %s85 = sphi 0, %s69
      %s91 = sphi 0, %s93
      %s94 = sphi 0, %s91
      %s95 = sphi 0, %s94
      %s111 = sphi 0, %s95
    $region4: #{tpu_custom_call.1} parent=1 // loop_header_branch
      %18 = sbr.rel (%p16) target = $region8
    $region5: #{tpu_custom_call.1} parent=1 // loop_body
      %s20 = ssub.s32 %s15, 1
      %s21 = ssub.s32 %s15, 2
      %s28 = sadd.s32 1, %s23
      %p29 = scmp.ge.s32.totalorder %s28, 1
      %s30 = scalar_select %p29, 0, %s28
      %s31 = sadd.s32 1, %s22
      %s32 = scalar_select %p29, %s31, %s22
      %p33 = scmp.ge.s32.totalorder %s32, 3
      %s34 = scalar_select %p33, 0, %s32
      %s35 = ssub.s32 %s22, %s34
      %s36 = ssub.s32 %s23, %s30
      %s37 = sor.u32 %s35, %s36
      %p38 = scmp.eq.s32.totalorder %s37, 0
      %s40 = sadd.s32 %s39, 1
      %s41 = scalar_select %p38, %s39, %s40
      %p44 = pneg %p38
      %p45 = scmp.eq.s32.totalorder %s15, 2
      %p46 = por %p44, %p45
      %p47 = scmp.ne.s32.totalorder %s39, %s42
      %p48 = scmp.eq.s32.totalorder %s15, 0
      %p49 = por %p47, %p48
      %p50 = scmp.ne.s32.totalorder %s39, %s42
      %p51 = scmp.eq.s32.totalorder %s20, 2
      %p52 = por %p50, %p51
      %p53 = scmp.ne.s32.totalorder %s42, %s43
      %p54 = scmp.eq.s32.totalorder %s20, 0
      %p55 = por %p53, %p54
      %p56 = scmp.ne.s32.totalorder %s42, %s43
      %p57 = scmp.eq.s32.totalorder %s21, 2
      %p58 = por %p56, %p57
      %p60 = scmp.ne.s32.totalorder %s43, %s59
      %p61 = scmp.eq.s32.totalorder %s21, 0
      %p62 = por %p60, %p61
      %s63 = ssub.s32 %s23, %s30
      %p64 = scmp.eq.s32.totalorder %s63, 0
      %s66 = sadd.s32 %s65, 1
      %s67 = scalar_select %p64, %s65, %s66
      %p70 = pneg %p64
      %p71 = scmp.eq.s32.totalorder %s15, 2
      %p72 = por %p70, %p71
      %p73 = scmp.ne.s32.totalorder %s65, %s68
      %p74 = scmp.eq.s32.totalorder %s15, 0
      %p75 = por %p73, %p74
      %p76 = scmp.ne.s32.totalorder %s65, %s68
      %p77 = scmp.eq.s32.totalorder %s20, 2
      %p78 = por %p76, %p77
      %p79 = scmp.ne.s32.totalorder %s68, %s69
      %p80 = scmp.eq.s32.totalorder %s20, 0
      %p81 = por %p79, %p80
      %p82 = scmp.ne.s32.totalorder %s68, %s69
      %p83 = scmp.eq.s32.totalorder %s21, 2
      %p84 = por %p82, %p83
      %p86 = scmp.ne.s32.totalorder %s69, %s85
      %p87 = scmp.eq.s32.totalorder %s21, 0
      %p88 = por %p86, %p87
      %s89 = ssub.s32 %s22, %s34
      %p90 = scmp.eq.s32.totalorder %s89, 0
      %s92 = sadd.s32 %s91, 1
      %s93 = scalar_select %p90, %s91, %s92
      %p96 = pneg %p90
      %p97 = scmp.eq.s32.totalorder %s15, 2
      %p98 = por %p96, %p97
      %p99 = scmp.ne.s32.totalorder %s91, %s94
      %p100 = scmp.eq.s32.totalorder %s15, 0
      %p101 = por %p99, %p100
      %p102 = scmp.ne.s32.totalorder %s91, %s94
      %p103 = scmp.eq.s32.totalorder %s20, 2
      %p104 = por %p102, %p103
      %p105 = scmp.ne.s32.totalorder %s94, %s95
      %p106 = scmp.eq.s32.totalorder %s20, 0
      %p107 = por %p105, %p106
      %p108 = scmp.ne.s32.totalorder %s94, %s95
      %p109 = scmp.eq.s32.totalorder %s21, 2
      %p110 = por %p108, %p109
      %p112 = scmp.ne.s32.totalorder %s95, %s111
      %p113 = scmp.eq.s32.totalorder %s21, 0
      %p114 = por %p112, %p113
      %p115 = scmp.le.s32.totalorder 1, %s15
      %p116 = scmp.lt.s32.totalorder %s15, 4
      %p117 = pnand %p115, %p116
      %p118 = pneg %p117
      // Predicated region
      $region9: #{tpu_custom_call.1} parent=5 // pred_check
        _
      $region10: #{tpu_custom_call.1} parent=5 // pred_check_branch
        %120 = sbr.rel (%p117) target = $region12
      $region11: #{tpu_custom_call.1} parent=5 // pred_region
        %s121 = ssub.s32 %s15, 1
        // Predicated region
        $region13: #{tpu_custom_call.1} parent=11 // pred_check
          %p122 = pneg %p81
        $region14: #{tpu_custom_call.1} parent=11 // pred_check_branch
          %124 = sbr.rel (%p122) target = $region16
        $region15: #{tpu_custom_call.1} parent=11 // pred_region
          %s125 = smul.u32 16, %s25
          %127 = vsyncadd [#allocation7], 0
          %s128 = smul.addr %s125, 4
          %s129 = scalar_lea.hbm %s1, %s128
          %s130 = sshll.u32 %s129, 4
          %s131 = int_to_ptr.hbm [resolvable:$true] %s130
          %s132 = sshll.u32 [#allocation6], 4
          %s133 = int_to_ptr.vmem [resolvable:$true] %s132
          %138 = dma.hbm_to_vmem [thread:$0]  %s131, 1024, %s133, [#allocation7], 64, 64, 4
        $region16: #{tpu_custom_call.1} parent=11 // pred_fallthru
          _
      $region12: #{tpu_custom_call.1} parent=5 // pred_fallthru
        _
      %p139 = scmp.lt.s32.totalorder %s15, 3
      // Predicated region
      $region17: #{tpu_custom_call.1} parent=5 // pred_check
        %p140 = pneg %p139
      $region18: #{tpu_custom_call.1} parent=5 // pred_check_branch
        %142 = sbr.rel (%p140) target = $region20
      $region19: #{tpu_custom_call.1} parent=5 // pred_region
        // Predicated region
        $region21: #{tpu_custom_call.1} parent=19 // pred_check
          %p143 = pneg %p49
        $region22: #{tpu_custom_call.1} parent=19 // pred_check_branch
          %145 = sbr.rel (%p143) target = $region24
        $region23: #{tpu_custom_call.1} parent=19 // pred_region
          %s146 = sand.u32 %s39, 1
          %s147 = scalar_lea.sflag [#allocation4], %s146
          %s148 = sand.u32 %s39, 1
          %s149 = smul.addr %s148, 64
          %s150 = scalar_lea.vmem [#allocation3], %s149
          %s151 = smul.u32 16, %s22
          %153 = vsyncadd %s147, 0
          %s154 = sadd.s32 %s23, %s151
          %s155 = smul.addr %s154, 4
          %s156 = scalar_lea.hbm %s0, %s155
          %s157 = sshll.u32 %s156, 4
          %s158 = int_to_ptr.hbm [resolvable:$true] %s157
          %s159 = sshll.u32 %s150, 4
          %s160 = int_to_ptr.vmem [resolvable:$true] %s159
          %165 = dma.hbm_to_vmem [thread:$0]  %s158, 1024, %s160, %s147, 64, 64, 4
        $region24: #{tpu_custom_call.1} parent=19 // pred_fallthru
          _
      $region20: #{tpu_custom_call.1} parent=5 // pred_fallthru
        _
      %p166 = scmp.le.s32.totalorder 1, %s15
      %p167 = scmp.lt.s32.totalorder %s15, 4
      %p168 = pnand %p166, %p167
      %p169 = pneg %p168
      // Predicated region
      $region25: #{tpu_custom_call.1} parent=5 // pred_check
        _
      $region26: #{tpu_custom_call.1} parent=5 // pred_check_branch
        %171 = sbr.rel (%p168) target = $region28
      $region27: #{tpu_custom_call.1} parent=5 // pred_region
        %s172 = ssub.s32 %s15, 1
        %s173 = sand.u32 %s42, 1
        %s174 = scalar_lea.sflag [#allocation4], %s173
        %s175 = sand.u32 %s42, 1
        %s176 = smul.addr %s175, 64
        %s177 = scalar_lea.vmem [#allocation3], %s176
        // Predicated region
        $region29: #{tpu_custom_call.1} parent=27 // pred_check
          %p178 = pneg %p55
        $region30: #{tpu_custom_call.1} parent=27 // pred_check_branch
          %180 = sbr.rel (%p178) target = $region32
        $region31: #{tpu_custom_call.1} parent=27 // pred_region
          %182 = dma.done %s174, 1024
        $region32: #{tpu_custom_call.1} parent=27 // pred_fallthru
          _
        // Predicated region
        $region33: #{tpu_custom_call.1} parent=27 // pred_check
          %p183 = pneg %p81
        $region34: #{tpu_custom_call.1} parent=27 // pred_check_branch
          %185 = sbr.rel (%p183) target = $region36
        $region35: #{tpu_custom_call.1} parent=27 // pred_region
          %187 = dma.done [#allocation7], 1024
        $region36: #{tpu_custom_call.1} parent=27 // pred_fallthru
          _
        %s188 = sand.u32 %s42, 1
        %s189 = scalar_lea.sflag [#allocation4], %s188
        %s190 = sand.u32 %s42, 1
        %s191 = smul.addr %s190, 64
        %s192 = scalar_lea.vmem [#allocation3], %s191
        %p193 = pneg %p55
        %p194 = pneg %p52
        %p195 = pneg %p81
        %p196 = pneg %p78
        %p197 = pneg %p107
        %p198 = pneg %p104
        %s199 = sand.u32 %s94, 1
        %s200 = scalar_lea.sflag [#allocation5], %s199
        %s201 = sand.u32 %s94, 1
        %s202 = smul.addr %s201, 64
        %s203 = scalar_lea.vmem [#allocation8], %s202
        %s204 = smul.u32 16, %s24
        %s205 = smul.u32 16, %s25
        %s206 = smul.u32 16, %s24
        %p207 = scmp.eq.s32.totalorder %s25, 0
        // Predicated region
        $region37: #{tpu_custom_call.1} parent=27 // pred_check
          %p208 = pneg %p207
        $region38: #{tpu_custom_call.1} parent=27 // pred_check_branch
          %210 = sbr.rel (%p208) target = $region40
        $region39: #{tpu_custom_call.1} parent=27 // pred_region
          %211 = vst [vmem:[#allocation2] sm:$0xff] 0.0
          %212 = vst [vmem:[#allocation2 + $0x8] sm:$0xff] 0.0
          %213 = vst [vmem:[#allocation2 + $0x10] sm:$0xff] 0.0
          %214 = vst [vmem:[#allocation2 + $0x18] sm:$0xff] 0.0
          %215 = vst [vmem:[#allocation2 + $0x20] sm:$0xff] 0.0
          %216 = vst [vmem:[#allocation2 + $0x28] sm:$0xff] 0.0
          %217 = vst [vmem:[#allocation2 + $0x30] sm:$0xff] 0.0
          %218 = vst [vmem:[#allocation2 + $0x38] sm:$0xff] 0.0
          %219 = vst [vmem:[#allocation2 + $0x40] sm:$0xff] 0.0
          %220 = vst [vmem:[#allocation2 + $0x48] sm:$0xff] 0.0
          %221 = vst [vmem:[#allocation2 + $0x50] sm:$0xff] 0.0
          %222 = vst [vmem:[#allocation2 + $0x58] sm:$0xff] 0.0
          %223 = vst [vmem:[#allocation2 + $0x60] sm:$0xff] 0.0
          %224 = vst [vmem:[#allocation2 + $0x68] sm:$0xff] 0.0
          %225 = vst [vmem:[#allocation2 + $0x70] sm:$0xff] 0.0
          %226 = vst [vmem:[#allocation2 + $0x78] sm:$0xff] 0.0
        $region40: #{tpu_custom_call.1} parent=27 // pred_fallthru
          _
        %v227 = vld [vmem:[#allocation2] sm:$0xff]
        %v228 = vld [vmem:[#allocation2 + $0x8] sm:$0xff]
        %v229 = vld [vmem:[#allocation2 + $0x10] sm:$0xff]
        %v230 = vld [vmem:[#allocation2 + $0x18] sm:$0xff]
        %v231 = vld [vmem:[#allocation2 + $0x20] sm:$0xff]
        %v232 = vld [vmem:[#allocation2 + $0x28] sm:$0xff]
        %v233 = vld [vmem:[#allocation2 + $0x30] sm:$0xff]
        %v234 = vld [vmem:[#allocation2 + $0x38] sm:$0xff]
        %v235 = vld [vmem:[#allocation2 + $0x40] sm:$0xff]
        %v236 = vld [vmem:[#allocation2 + $0x48] sm:$0xff]
        %v237 = vld [vmem:[#allocation2 + $0x50] sm:$0xff]
        %v238 = vld [vmem:[#allocation2 + $0x58] sm:$0xff]
        %v239 = vld [vmem:[#allocation2 + $0x60] sm:$0xff]
        %v240 = vld [vmem:[#allocation2 + $0x68] sm:$0xff]
        %v241 = vld [vmem:[#allocation2 + $0x70] sm:$0xff]
        %v242 = vld [vmem:[#allocation2 + $0x78] sm:$0xff]
        %v243 = vld [vmem:[%s177] sm:$0xf]
        %v244 = vld [vmem:[%s177 + $0x4] sm:$0xf]
        %v245 = vld [vmem:[%s177 + $0x8] sm:$0xf]
        %v246 = vld [vmem:[%s177 + $0xc] sm:$0xf]
        %v247 = vld [vmem:[%s177 + $0x10] sm:$0xf]
        %v248 = vld [vmem:[%s177 + $0x14] sm:$0xf]
        %v249 = vld [vmem:[%s177 + $0x18] sm:$0xf]
        %v250 = vld [vmem:[%s177 + $0x1c] sm:$0xf]
        %v251 = vld [vmem:[%s177 + $0x20] sm:$0xf]
        %v252 = vld [vmem:[%s177 + $0x24] sm:$0xf]
        %v253 = vld [vmem:[%s177 + $0x28] sm:$0xf]
        %v254 = vld [vmem:[%s177 + $0x2c] sm:$0xf]
        %v255 = vld [vmem:[%s177 + $0x30] sm:$0xf]
        %v256 = vld [vmem:[%s177 + $0x34] sm:$0xf]
        %v257 = vld [vmem:[%s177 + $0x38] sm:$0xf]
        %v258 = vld [vmem:[%s177 + $0x3c] sm:$0xf]
        %v259 = vld [vmem:[#allocation6] sm:$0xf]
        %v260 = vld [vmem:[#allocation6 + $0x4] sm:$0xf]
        %v261 = vld [vmem:[#allocation6 + $0x8] sm:$0xf]
        %v262 = vld [vmem:[#allocation6 + $0xc] sm:$0xf]
        %v263 = vld [vmem:[#allocation6 + $0x10] sm:$0xf]
        %v264 = vld [vmem:[#allocation6 + $0x14] sm:$0xf]
        %v265 = vld [vmem:[#allocation6 + $0x18] sm:$0xf]
        %v266 = vld [vmem:[#allocation6 + $0x1c] sm:$0xf]
        %v267 = vld [vmem:[#allocation6 + $0x20] sm:$0xf]
        %v268 = vld [vmem:[#allocation6 + $0x24] sm:$0xf]
        %v269 = vld [vmem:[#allocation6 + $0x28] sm:$0xf]
        %v270 = vld [vmem:[#allocation6 + $0x2c] sm:$0xf]
        %v271 = vld [vmem:[#allocation6 + $0x30] sm:$0xf]
        %v272 = vld [vmem:[#allocation6 + $0x34] sm:$0xf]
        %v273 = vld [vmem:[#allocation6 + $0x38] sm:$0xf]
        %v274 = vld [vmem:[#allocation6 + $0x3c] sm:$0xf]
        %v291 = vunpack.c.l.b16 %v243
        %v292 = vunpack.c.l.b16 %v244
        %v293 = vunpack.c.l.b16 %v245
        %v294 = vunpack.c.l.b16 %v246
        %v295 = vunpack.c.l.b16 %v247
        %v296 = vunpack.c.l.b16 %v248
        %v297 = vunpack.c.l.b16 %v249
        %v298 = vunpack.c.l.b16 %v250
        %v299 = vunpack.c.l.b16 %v251
        %v300 = vunpack.c.l.b16 %v252
        %v301 = vunpack.c.l.b16 %v253
        %v302 = vunpack.c.l.b16 %v254
        %v303 = vunpack.c.l.b16 %v255
        %v304 = vunpack.c.l.b16 %v256
        %v305 = vunpack.c.l.b16 %v257
        %v306 = vunpack.c.l.b16 %v258
        %v307 = vpack.c.b16 %v292, %v291
        %v308 = vpack.c.b16 %v294, %v293
        %v309 = vpack.c.b16 %v296, %v295
        %v310 = vpack.c.b16 %v298, %v297
        %v311 = vpack.c.b16 %v300, %v299
        %v312 = vpack.c.b16 %v302, %v301
        %v313 = vpack.c.b16 %v304, %v303
        %v314 = vpack.c.b16 %v306, %v305
        %v339 = vunpack.c.l.b16 %v259
        %v340 = vunpack.c.l.b16 %v260
        %v341 = vunpack.c.l.b16 %v261
        %v342 = vunpack.c.l.b16 %v262
        %v343 = vunpack.c.l.b16 %v263
        %v344 = vunpack.c.l.b16 %v264
        %v345 = vunpack.c.l.b16 %v265
        %v346 = vunpack.c.l.b16 %v266
        %v347 = vunpack.c.l.b16 %v267
        %v348 = vunpack.c.l.b16 %v268
        %v349 = vunpack.c.l.b16 %v269
        %v350 = vunpack.c.l.b16 %v270
        %v351 = vunpack.c.l.b16 %v271
        %v352 = vunpack.c.l.b16 %v272
        %v353 = vunpack.c.l.b16 %v273
        %v354 = vunpack.c.l.b16 %v274
        %v355 = vpack.c.b16 %v340, %v339
        %v356 = vpack.c.b16 %v342, %v341
        %v357 = vpack.c.b16 %v344, %v343
        %v358 = vpack.c.b16 %v346, %v345
        %v359 = vpack.c.b16 %v348, %v347
        %v360 = vpack.c.b16 %v350, %v349
        %v361 = vpack.c.b16 %v352, %v351
        %v362 = vpack.c.b16 %v354, %v353
        %371 = vmatpush.bf16.msra.mxu0 %v362
        %372 = vmatpush.bf16.msra.mxu0 %v361
        %373 = vmatpush.bf16.msra.mxu0 %v360
        %374 = vmatpush.bf16.msra.mxu0 %v359
        %375 = vmatpush.bf16.msra.mxu0 %v358
        %376 = vmatpush.bf16.msra.mxu0 %v357
        %377 = vmatpush.bf16.msra.mxu0 %v356
        %378 = vmatpush.bf16.msra.mxu0 %v355
        %379 = vmatmul.bf16.gmra.mxu0 %v307
        %v380 = vpop.f32.mrf.mxu0
        %v381 = vadd.f32 0.0, %v380
        %v382 = vpop.f32.mrf.mxu0
        %v383 = vadd.f32 0.0, %v382
        %384 = vmatmul.bf16.gmra.mxu0 %v308
        %v385 = vpop.f32.mrf.mxu0
        %v386 = vadd.f32 0.0, %v385
        %v387 = vpop.f32.mrf.mxu0
        %v388 = vadd.f32 0.0, %v387
        %389 = vmatmul.bf16.gmra.mxu0 %v309
        %v390 = vpop.f32.mrf.mxu0
        %v391 = vadd.f32 0.0, %v390
        %v392 = vpop.f32.mrf.mxu0
        %v393 = vadd.f32 0.0, %v392
        %394 = vmatmul.bf16.gmra.mxu0 %v310
        %v395 = vpop.f32.mrf.mxu0
        %v396 = vadd.f32 0.0, %v395
        %v397 = vpop.f32.mrf.mxu0
        %v398 = vadd.f32 0.0, %v397
        %399 = vmatmul.bf16.gmra.mxu0 %v311
        %v400 = vpop.f32.mrf.mxu0
        %v401 = vadd.f32 0.0, %v400
        %v402 = vpop.f32.mrf.mxu0
        %v403 = vadd.f32 0.0, %v402
        %404 = vmatmul.bf16.gmra.mxu0 %v312
        %v405 = vpop.f32.mrf.mxu0
        %v406 = vadd.f32 0.0, %v405
        %v407 = vpop.f32.mrf.mxu0
        %v408 = vadd.f32 0.0, %v407
        %409 = vmatmul.bf16.gmra.mxu0 %v313
        %v410 = vpop.f32.mrf.mxu0
        %v411 = vadd.f32 0.0, %v410
        %v412 = vpop.f32.mrf.mxu0
        %v413 = vadd.f32 0.0, %v412
        %414 = vmatmul.bf16.gmra.mxu0 %v314
        %v415 = vpop.f32.mrf.mxu0
        %v416 = vadd.f32 0.0, %v415
        %v417 = vpop.f32.mrf.mxu0
        %v418 = vadd.f32 0.0, %v417
        %419 = vdwg.mxu0
        %v420 = vadd.f32 %v227, %v381
        %v421 = vadd.f32 %v228, %v383
        %v422 = vadd.f32 %v229, %v386
        %v423 = vadd.f32 %v230, %v388
        %v424 = vadd.f32 %v231, %v391
        %v425 = vadd.f32 %v232, %v393
        %v426 = vadd.f32 %v233, %v396
        %v427 = vadd.f32 %v234, %v398
        %v428 = vadd.f32 %v235, %v401
        %v429 = vadd.f32 %v236, %v403
        %v430 = vadd.f32 %v237, %v406
        %v431 = vadd.f32 %v238, %v408
        %v432 = vadd.f32 %v239, %v411
        %v433 = vadd.f32 %v240, %v413
        %v434 = vadd.f32 %v241, %v416
        %v435 = vadd.f32 %v242, %v418
        %436 = vst [vmem:[#allocation2] sm:$0xff] %v420
        %437 = vst [vmem:[#allocation2 + $0x8] sm:$0xff] %v421
        %438 = vst [vmem:[#allocation2 + $0x10] sm:$0xff] %v422
        %439 = vst [vmem:[#allocation2 + $0x18] sm:$0xff] %v423
        %440 = vst [vmem:[#allocation2 + $0x20] sm:$0xff] %v424
        %441 = vst [vmem:[#allocation2 + $0x28] sm:$0xff] %v425
        %442 = vst [vmem:[#allocation2 + $0x30] sm:$0xff] %v426
        %443 = vst [vmem:[#allocation2 + $0x38] sm:$0xff] %v427
        %444 = vst [vmem:[#allocation2 + $0x40] sm:$0xff] %v428
        %445 = vst [vmem:[#allocation2 + $0x48] sm:$0xff] %v429
        %446 = vst [vmem:[#allocation2 + $0x50] sm:$0xff] %v430
        %447 = vst [vmem:[#allocation2 + $0x58] sm:$0xff] %v431
        %448 = vst [vmem:[#allocation2 + $0x60] sm:$0xff] %v432
        %449 = vst [vmem:[#allocation2 + $0x68] sm:$0xff] %v433
        %450 = vst [vmem:[#allocation2 + $0x70] sm:$0xff] %v434
        %451 = vst [vmem:[#allocation2 + $0x78] sm:$0xff] %v435
        // Predicated region
        $region41: #{tpu_custom_call.1} parent=27 // pred_check
          %p452 = pneg %p207
        $region42: #{tpu_custom_call.1} parent=27 // pred_check_branch
          %454 = sbr.rel (%p452) target = $region44
        $region43: #{tpu_custom_call.1} parent=27 // pred_region
          %v455 = vld [vmem:[#allocation2] sm:$0xff]
          %v456 = vld [vmem:[#allocation2 + $0x8] sm:$0xff]
          %v457 = vld [vmem:[#allocation2 + $0x10] sm:$0xff]
          %v458 = vld [vmem:[#allocation2 + $0x18] sm:$0xff]
          %v459 = vld [vmem:[#allocation2 + $0x20] sm:$0xff]
          %v460 = vld [vmem:[#allocation2 + $0x28] sm:$0xff]
          %v461 = vld [vmem:[#allocation2 + $0x30] sm:$0xff]
          %v462 = vld [vmem:[#allocation2 + $0x38] sm:$0xff]
          %v463 = vld [vmem:[#allocation2 + $0x40] sm:$0xff]
          %v464 = vld [vmem:[#allocation2 + $0x48] sm:$0xff]
          %v465 = vld [vmem:[#allocation2 + $0x50] sm:$0xff]
          %v466 = vld [vmem:[#allocation2 + $0x58] sm:$0xff]
          %v467 = vld [vmem:[#allocation2 + $0x60] sm:$0xff]
          %v468 = vld [vmem:[#allocation2 + $0x68] sm:$0xff]
          %v469 = vld [vmem:[#allocation2 + $0x70] sm:$0xff]
          %v470 = vld [vmem:[#allocation2 + $0x78] sm:$0xff]
          %v471 = vpack.c.bf16 %v455, %v455
          %v472 = vpack.c.bf16 %v456, %v456
          %v473 = vpack.c.bf16 %v457, %v457
          %v474 = vpack.c.bf16 %v458, %v458
          %v475 = vpack.c.bf16 %v459, %v459
          %v476 = vpack.c.bf16 %v460, %v460
          %v477 = vpack.c.bf16 %v461, %v461
          %v478 = vpack.c.bf16 %v462, %v462
          %v479 = vpack.c.bf16 %v463, %v463
          %v480 = vpack.c.bf16 %v464, %v464
          %v481 = vpack.c.bf16 %v465, %v465
          %v482 = vpack.c.bf16 %v466, %v466
          %v483 = vpack.c.bf16 %v467, %v467
          %v484 = vpack.c.bf16 %v468, %v468
          %v485 = vpack.c.bf16 %v469, %v469
          %v486 = vpack.c.bf16 %v470, %v470
          %487 = vst [vmem:[%s203] sm:$0xf] %v471
          %488 = vst [vmem:[%s203 + $0x4] sm:$0xf] %v472
          %489 = vst [vmem:[%s203 + $0x8] sm:$0xf] %v473
          %490 = vst [vmem:[%s203 + $0xc] sm:$0xf] %v474
          %491 = vst [vmem:[%s203 + $0x10] sm:$0xf] %v475
          %492 = vst [vmem:[%s203 + $0x14] sm:$0xf] %v476
          %493 = vst [vmem:[%s203 + $0x18] sm:$0xf] %v477
          %494 = vst [vmem:[%s203 + $0x1c] sm:$0xf] %v478
          %495 = vst [vmem:[%s203 + $0x20] sm:$0xf] %v479
          %496 = vst [vmem:[%s203 + $0x24] sm:$0xf] %v480
          %497 = vst [vmem:[%s203 + $0x28] sm:$0xf] %v481
          %498 = vst [vmem:[%s203 + $0x2c] sm:$0xf] %v482
          %499 = vst [vmem:[%s203 + $0x30] sm:$0xf] %v483
          %500 = vst [vmem:[%s203 + $0x34] sm:$0xf] %v484
          %501 = vst [vmem:[%s203 + $0x38] sm:$0xf] %v485
          %502 = vst [vmem:[%s203 + $0x3c] sm:$0xf] %v486
        $region44: #{tpu_custom_call.1} parent=27 // pred_fallthru
          _
        %s503 = sand.u32 %s94, 1
        %s504 = scalar_lea.sflag [#allocation5], %s503
        %s505 = sand.u32 %s94, 1
        %s506 = smul.addr %s505, 64
        %s507 = scalar_lea.vmem [#allocation8], %s506
        // Predicated region
        $region45: #{tpu_custom_call.1} parent=27 // pred_check
          %p508 = pneg %p104
        $region46: #{tpu_custom_call.1} parent=27 // pred_check_branch
          %510 = sbr.rel (%p508) target = $region48
        $region47: #{tpu_custom_call.1} parent=27 // pred_region
          %s511 = smul.u32 16, %s24
          %513 = vsyncadd %s504, 0
          %s514 = smul.addr %s511, 4
          %s515 = scalar_lea.hbm %s2, %s514
          %s516 = sshll.u32 %s507, 4
          %s517 = int_to_ptr.vmem [resolvable:$true] %s516
          %s518 = sshll.u32 %s515, 4
          %s519 = int_to_ptr.hbm [resolvable:$true] %s518
          %524 = dma.vmem_to_hbm [thread:$0]  %s517, 1024, %s519, %s504, 64, 64, 4
        $region48: #{tpu_custom_call.1} parent=27 // pred_fallthru
          _
      $region28: #{tpu_custom_call.1} parent=5 // pred_fallthru
        _
      %p525 = scmp.le.s32.totalorder 2, %s15
      // Predicated region
      $region49: #{tpu_custom_call.1} parent=5 // pred_check
        %p526 = pneg %p525
      $region50: #{tpu_custom_call.1} parent=5 // pred_check_branch
        %528 = sbr.rel (%p526) target = $region52
      $region51: #{tpu_custom_call.1} parent=5 // pred_region
        %s529 = ssub.s32 %s15, 2
        // Predicated region
        $region53: #{tpu_custom_call.1} parent=51 // pred_check
          %p530 = pneg %p110
        $region54: #{tpu_custom_call.1} parent=51 // pred_check_branch
          %532 = sbr.rel (%p530) target = $region56
        $region55: #{tpu_custom_call.1} parent=51 // pred_region
          %s533 = sand.u32 %s95, 1
          %s534 = scalar_lea.sflag [#allocation5], %s533
          %s535 = sand.u32 %s95, 1
          %s536 = smul.addr %s535, 64
          %s537 = scalar_lea.vmem [#allocation8], %s536
          %539 = dma.done %s534, 1024
        $region56: #{tpu_custom_call.1} parent=51 // pred_fallthru
          _
      $region52: #{tpu_custom_call.1} parent=5 // pred_fallthru
        _
    $region6: #{tpu_custom_call.1} parent=1 // loop_footer
      %s19 = sadd.s32 1, %s15
    $region7: #{tpu_custom_call.1} parent=1 // loop_footer_branch
      %14 = sbr.rel target = $region3
    $region8: #{tpu_custom_call.1} parent=1 // loop_exit
      _
    %540 = vsyncpa [#allocation4], 1
    %s541 = scalar_lea.sflag [#allocation4], 1
    %542 = vsyncpa %s541, 1
    %543 = vsyncpa [#allocation7], 1
    %544 = vsyncpa [#allocation5], 1
    %s545 = scalar_lea.sflag [#allocation5], 1
    %546 = vsyncpa %s545, 1

</llo_original>
